<compile_context>
chip_gen: v7x
topology: tpu7x:2x2x1
jax: 0.10.0
libtpu: 0.0.40
codegen_flags: <defaults>
</compile_context>

<pallas_src>
import functools

import jax
import jax.numpy as jnp
from jax.experimental import pallas as pl
from jax.experimental.pallas import tpu as pltpu


def _ce_zero_target_kernel(x_ref, o_ref, *, n_rows, row_tile, tiles_per_core):
    c = pl.program_id(0)   # core-split axis ("parallel")
    t = pl.program_id(1)   # row-tile axis within this core ("arbitrary" / accumulation)

    @pl.when(t == 0)
    def _init():
        o_ref[...] = jnp.zeros_like(o_ref)

    x = x_ref[...].astype(jnp.float32)                       # (row_tile, C), upcast on VPU
    m = jnp.max(x, axis=-1, keepdims=True)                   # (row_tile, 1)
    lse = jnp.log(jnp.sum(jnp.exp(x - m), axis=-1, keepdims=True)) + m
    per_sample = lse - x[:, 0:1]                             # (row_tile, 1): CE vs class 0

    # Mask rows outside the real batch (ragged last tile / tiles past the array end).
    logical_tile = c * tiles_per_core + t
    row_ids = logical_tile * row_tile + jax.lax.broadcasted_iota(
        jnp.int32, (row_tile, 1), 0)
    per_sample = jnp.where(row_ids < n_rows, per_sample, 0.0)

    # Scalar partial sum broadcast-added into this core's resident output block.
    o_ref[...] += jnp.sum(per_sample)


def contrastive_loss(inputs, reduction="mean", block_rows=1024):
    """inputs: (N, C) logits (any float dtype). CE against target class 0."""
    assert inputs.ndim == 2
    n, c_dim = inputs.shape
    itemsize = jnp.dtype(inputs.dtype).itemsize

    # Row tile: keep the double-buffered input <= ~16 MiB; sublane dim a multiple of 32
    # (covers f32 / bf16 / int8 packing); a single full-height block for small N.
    target_block_bytes = 8 * 1024 * 1024
    tn = max(1, target_block_bytes // max(1, c_dim * itemsize))
    tn = min(tn, block_rows)
    tn = max(32, (tn // 32) * 32)
    if n <= tn:
        tn = n

    num_tiles = pl.cdiv(n, tn)
    ncores = min(2, num_tiles)              # exploit v7x's 2 TCs; harmless elsewhere
    tiles_per_core = pl.cdiv(num_tiles, ncores)

    def x_index_map(c, t):
        # Clamp the *physical* block so we never DMA past the array; out-of-range
        # logical tiles are fully masked (contribute 0) inside the kernel.
        return (jnp.minimum(c * tiles_per_core + t, num_tiles - 1), 0)

    kernel = functools.partial(
        _ce_zero_target_kernel,
        n_rows=n, row_tile=tn, tiles_per_core=tiles_per_core)

    partials = pl.pallas_call(
        kernel,
        out_shape=jax.ShapeDtypeStruct((ncores, 8, 128), jnp.float32),
        grid=(ncores, tiles_per_core),
        in_specs=[pl.BlockSpec((tn, c_dim), x_index_map)],
        out_specs=pl.BlockSpec((1, 8, 128), lambda c, t: (c, 0, 0)),
        compiler_params=pltpu.CompilerParams(
            dimension_semantics=("parallel", "arbitrary"),
            vmem_limit_bytes=32 * 1024 * 1024),
        cost_estimate=pl.CostEstimate(
            flops=5 * n * c_dim,
            transcendentals=n * c_dim,
            bytes_accessed=n * c_dim * itemsize + ncores * 8 * 128 * 4),
    )(inputs)   # note: native dtype, no wrapper-side f32 cast

    total = jnp.sum(partials[:, 0, 0])
    if reduction == "mean":
        return total / n
    if reduction == "sum":
        return total
    # TODO(synk): reduction='none' would need a per-row (N,) output spec.
    raise NotImplementedError(f"reduction={reduction!r} not supported")


if __name__ == "__main__":
    key = jax.random.PRNGKey(0)

    # Test 1: small f32 batch (single tile, single core).
    N1, C1 = 8, 128
    logits1 = jax.random.normal(key, (N1, C1), dtype=jnp.float32)
    loss1 = jax.block_until_ready(contrastive_loss(logits1))
    ref1 = jnp.mean(jax.nn.logsumexp(logits1, axis=-1) - logits1[:, 0])
    assert jnp.allclose(loss1, ref1, atol=1e-5, rtol=1e-5), (loss1, ref1)

    # Test 2: bf16 input, ragged last tile, exercises the 2-way core split + masking.
    N2, C2 = 72, 128
    logits2 = jax.random.normal(jax.random.PRNGKey(1), (N2, C2)).astype(jnp.bfloat16)
    loss2 = jax.block_until_ready(contrastive_loss(logits2, block_rows=32))
    x2 = logits2.astype(jnp.float32)
    ref2 = jnp.mean(jax.nn.logsumexp(x2, axis=-1) - x2[:, 0])
    assert jnp.allclose(loss2, ref2, atol=1e-4, rtol=1e-4), (loss2, ref2)

    print("KERNEL_OK")
</pallas_src>

<mosaic_0001>
module attributes {stable_mosaic.version = 11 : i64} {
  func.func @_ce_zero_target_kernel(%arg0: i32, %arg1: i32, %arg2: memref<8x128xf32, #tpu.memory_space<vmem>>, %arg3: memref<1x8x128xf32, #tpu.memory_space<vmem>>) attributes {dimension_semantics = [#tpu.dimension_semantics<parallel>, #tpu.dimension_semantics<arbitrary>], iteration_bounds = array<i64: 1, 1>, scalar_prefetch = 0 : i64, scratch_operands = 0 : i64, tpu.core_type = #tpu.core_type<tc>, window_params = [{transform_indices = @transform_0, window_bounds = array<i64: 8, 128>}, {transform_indices = @transform_1, window_bounds = array<i64: 1, 8, 128>}]} {
    %c0_i32 = arith.constant 0 : i32
    %0 = arith.cmpi eq, %arg1, %c0_i32 : i32
    %1 = arith.extui %0 : i1 to i32
    %c0_i32_0 = arith.constant 0 : i32
    %2 = arith.cmpi ne, %1, %c0_i32_0 : i32
    scf.if %2 {
      %cst_12 = arith.constant 0.000000e+00 : f32
      %33 = vector.broadcast %cst_12 : f32 to vector<1x8x128xf32>
      %c0_13 = arith.constant 0 : index
      %c0_14 = arith.constant 0 : index
      %c0_15 = arith.constant 0 : index
      %34 = vector.load %arg3[%c0_13, %c0_14, %c0_15] : memref<1x8x128xf32, #tpu.memory_space<vmem>>, vector<1x8x128xf32>
      tpu.vector_store %arg3[%c0_13, %c0_14, %c0_15], %33 {strides = array<i32>} : memref<1x8x128xf32, #tpu.memory_space<vmem>>, vector<1x8x128xf32>,
    } else {
    }
    %c0 = arith.constant 0 : index
    %c0_1 = arith.constant 0 : index
    %3 = vector.load %arg2[%c0, %c0_1] : memref<8x128xf32, #tpu.memory_space<vmem>>, vector<8x128xf32>
    %cst = arith.constant dense<0xFF800000> : vector<8xf32>
    %4 = vector.multi_reduction <maximumf>, %3, %cst [1] : vector<8x128xf32> to vector<8xf32>
    %5 = vector.shape_cast %4 : vector<8xf32> to vector<8x1xf32>
    %6 = vector.broadcast %5 : vector<8x1xf32> to vector<8x128xf32>
    %7 = arith.subf %3, %6 : vector<8x128xf32>
    %8 = math.exp %7 : vector<8x128xf32>
    %cst_2 = arith.constant dense<0.000000e+00> : vector<8xf32>
    %9 = vector.multi_reduction <add>, %8, %cst_2 [1] : vector<8x128xf32> to vector<8xf32>
    %10 = vector.shape_cast %9 : vector<8xf32> to vector<8x1xf32>
    %11 = math.log %10 : vector<8x1xf32>
    %12 = arith.addf %11, %5 : vector<8x1xf32>
    %13 = vector.extract_strided_slice %3 {offsets = [0, 0], sizes = [8, 1], strides = [1, 1]} : vector<8x128xf32> to vector<8x1xf32>
    %14 = arith.subf %12, %13 : vector<8x1xf32>
    %c1_i32 = arith.constant 1 : i32
    %15 = arith.muli %arg0, %c1_i32 : i32
    %16 = arith.addi %15, %arg1 : i32
    %c8_i32 = arith.constant 8 : i32
    %17 = arith.muli %16, %c8_i32 : i32
    %18 = tpu.iota {dimensions = array<i32: 0>} : vector<8x1xi32>
    %19 = vector.broadcast %17 : i32 to vector<8x1xi32>
    %20 = arith.addi %19, %18 : vector<8x1xi32>
    %c8_i32_3 = arith.constant 8 : i32
    %21 = vector.broadcast %c8_i32_3 : i32 to vector<8x1xi32>
    %22 = arith.cmpi slt, %20, %21 : vector<8x1xi32>
    %cst_4 = arith.constant 0.000000e+00 : f32
    %23 = vector.broadcast %cst_4 : f32 to vector<8x1xf32>
    %24 = arith.select %22, %14, %23 : vector<8x1xi1>, vector<8x1xf32>
    %c0_5 = arith.constant 0 : index
    %c0_6 = arith.constant 0 : index
    %c0_7 = arith.constant 0 : index
    %25 = vector.load %arg3[%c0_5, %c0_6, %c0_7] : memref<1x8x128xf32, #tpu.memory_space<vmem>>, vector<1x8x128xf32>
    %26 = vector.shape_cast %24 : vector<8x1xf32> to vector<1x8x1xf32>
    %cst_8 = arith.constant dense<0.000000e+00> : vector<1xf32>
    %27 = vector.multi_reduction <add>, %26, %cst_8 [1, 2] : vector<1x8x1xf32> to vector<1xf32>
    %28 = vector.shape_cast %27 : vector<1xf32> to vector<1x1x1xf32>
    %29 = vector.extract %28[0, 0, 0] : f32 from vector<1x1x1xf32>
    %30 = vector.broadcast %29 : f32 to vector<1x8x128xf32>
    %31 = arith.addf %25, %30 : vector<1x8x128xf32>
    %c0_9 = arith.constant 0 : index
    %c0_10 = arith.constant 0 : index
    %c0_11 = arith.constant 0 : index
    %32 = vector.load %arg3[%c0_9, %c0_10, %c0_11] : memref<1x8x128xf32, #tpu.memory_space<vmem>>, vector<1x8x128xf32>
    tpu.vector_store %arg3[%c0_9, %c0_10, %c0_11], %31 {strides = array<i32>} : memref<1x8x128xf32, #tpu.memory_space<vmem>>, vector<1x8x128xf32>,
    return
  }
  func.func @transform_0(%arg0: i32, %arg1: i32) -> (i32, i32) {
    %c1_i32 = arith.constant 1 : i32
    %0 = arith.muli %arg0, %c1_i32 : i32
    %1 = arith.addi %0, %arg1 : i32
    %c0_i32 = arith.constant 0 : i32
    %2 = arith.minsi %1, %c0_i32 : i32
    %c0_i32_0 = arith.constant 0 : i32
    %c0_i32_1 = arith.constant 0 : i32
    return %2, %c0_i32_0 : i32, i32
  }
  func.func @transform_1(%arg0: i32, %arg1: i32) -> (i32, i32, i32) {
    %c0_i32 = arith.constant 0 : i32
    %c0_i32_0 = arith.constant 0 : i32
    %c0_i32_1 = arith.constant 0 : i32
    return %arg0, %c0_i32, %c0_i32_0 : i32, i32, i32
  }
}

</mosaic_0001>

<llo_original>
// kernel: tpu_custom_call.1
$region0: #{tpu_custom_call.1}
  #allocation0 [shape = 'u32[]', space=smem, size = 0x4, offset = 0x4, fixed_abs, tag = 'smem constant byte address 0x4 - core index']
  #allocation1 [shape = 'u32[144,128]{1,0:T(1,128)}', space=vmem, size = 0x12000, scoped, tag = 'internal scratch']
  %s0 = inlined_call_operand.hbm [shape: f32[8,128], index: 0, kind: input, shape index: {}]
  %s1 = inlined_call_operand.hbm [shape: f32[1,8,128], index: 1, kind: output, shape index: {}]
  %s2 = sld [smem:[#allocation0]]
  $region22: #{tpu_custom_call.1} parent=0
    _
  %s4 = ssub.s32 1, %s2
  %s5 = scalar_select 0, %s4, %s2
  $region1: #{tpu_custom_call.1} parent=0
    #allocation2 [shape = 'u8[4096]{0}', space=vmem, size = 0x1000, scoped, tag = 'input window, operand 0, single buffered']
    #allocation3 [shape = 's32[1]{0}', space=sflag, size = 0x4, scoped, tag = 'scoped memory for tpu_custom_call.1']
    #allocation4 [shape = 's32[1]{0}', space=sflag, size = 0x4, scoped, tag = 'scoped memory for tpu_custom_call.1']
    #allocation5 [shape = 'u8[4096]{0}', space=vmem, size = 0x1000, scoped, tag = 'output window, operand 0, single buffered']
    %6 = vsyncpa [#allocation3], 0
    %7 = vsyncpa [#allocation4], 0
    // Predicated region
    $region2: #{tpu_custom_call.1} parent=1 // pred_check
      _
    $region3: #{tpu_custom_call.1} parent=1 // pred_check_branch
      %9 = sbr.rel (0) target = $region5
    $region4: #{tpu_custom_call.1} parent=1 // pred_region
      %s10 = sadd.s32 0, 0
      %p11 = scmp.lt.s32.totalorder %s10, 0
      %s12 = scalar_select %p11, %s10, 0
      %s14 = ssub.s32 128, 128
      %15 = vsyncadd [#allocation3], %s14
      %s16 = smul.addr %s12, 128
      %s17 = scalar_lea.hbm %s0, %s16
      %s19 = sshll.u32 [#allocation2], 4
      %s20 = int_to_ptr.vmem [resolvable:$true] %s19
      %22 = dma.hbm_to_vmem [thread:$0]  %s17, 128, %s20, [#allocation3]
    $region5: #{tpu_custom_call.1} parent=1 // pred_fallthru
      _
    // Predicated region
    $region6: #{tpu_custom_call.1} parent=1 // pred_check
      _
    $region7: #{tpu_custom_call.1} parent=1 // pred_check_branch
      %24 = sbr.rel (0) target = $region9
    $region8: #{tpu_custom_call.1} parent=1 // pred_region
      %25 = dma.done [#allocation3], 128
    $region9: #{tpu_custom_call.1} parent=1 // pred_fallthru
      _
    %s26 = sadd.s32 0, 0
    %p27 = scmp.lt.s32.totalorder %s26, 0
    %s28 = scalar_select %p27, %s26, 0
    %p29 = scmp.eq.s32.totalorder 0, 0
    // Predicated region
    $region10: #{tpu_custom_call.1} parent=1 // pred_check
      %p30 = pneg %p29
    $region11: #{tpu_custom_call.1} parent=1 // pred_check_branch
      %32 = sbr.rel (%p30) target = $region13
    $region12: #{tpu_custom_call.1} parent=1 // pred_region
      %33 = vst [vmem:[#allocation5] sm:$0xff] 0.0
    $region13: #{tpu_custom_call.1} parent=1 // pred_fallthru
      _
    %v34 = vld [vmem:[#allocation2] sm:$0xff]
    %35 = vmax.xlane.f32.xlu0 %v34
    %v36 = vpop.xlane.xlu0 %35
    %v37 = vsub.f32 %v34, %v36
    %v38 = vmul.f32 %v37, 1.442695
    %v39 = vpow.pop %v38
    %40 = vadd.xlane.f32.xlu0 %v39
    %v41 = vpop.xlane.xlu0 %40
    %v42 = vlog2.pop %v41
    %v43 = vmul.f32 %v42, 0.6931472
    %v44 = vadd.f32 %v43, %v36
    %v45 = vsub.f32 %v44, %v34
    %s46 = sadd.s32 0, 0
    %s47 = smul.u32 %s46, 8
    %v48 = vlaneseq
    %v49 = vshrl.u32 %v48, 7
    %v50 = vstv %s47
    %v51 = vadd.s32 %v50, %v49
    %vm52 = vcmp.lt.s32.totalorder %v51, 8
    %v53 = vsel %vm52, %v45, 0.0
    %v54 = vld [vmem:[#allocation5] sm:$0xff]
    %vm55 = vcmask 7168
    %v56 = vsel %vm55, %v53, 0.0
    %57 = vadd.xlane.f32.xlu0 %v56
    %v58 = vpop.xlane.xlu0 %57
    %v59 = vrot.slane %v58, 4
    %v60 = vadd.f32 %v58, %v59
    %v61 = vrot.slane %v60, 2
    %v62 = vadd.f32 %v60, %v61
    %v63 = vrot.slane %v62, 1
    %v64 = vadd.f32 %v62, %v63
    %s65 = vtos %v64
    %v66 = vstv %s65
    %v67 = vadd.f32 %v54, %v66
    %68 = vst [vmem:[#allocation5] sm:$0xff] %v67
    // Predicated region
    $region14: #{tpu_custom_call.1} parent=1 // pred_check
      _
    $region15: #{tpu_custom_call.1} parent=1 // pred_check_branch
      %70 = sbr.rel (0) target = $region17
    $region16: #{tpu_custom_call.1} parent=1 // pred_region
      %s72 = ssub.s32 128, 128
      %73 = vsyncadd [#allocation4], %s72
      %s75 = sshll.u32 [#allocation5], 4
      %s76 = int_to_ptr.vmem [resolvable:$true] %s75
      %78 = dma.vmem_to_hbm [thread:$0]  %s76, 128, %s1, [#allocation4]
    $region17: #{tpu_custom_call.1} parent=1 // pred_fallthru
      _
    // Predicated region
    $region18: #{tpu_custom_call.1} parent=1 // pred_check
      _
    $region19: #{tpu_custom_call.1} parent=1 // pred_check_branch
      %80 = sbr.rel (0) target = $region21
    $region20: #{tpu_custom_call.1} parent=1 // pred_region
      %81 = dma.done [#allocation4], 128
    $region21: #{tpu_custom_call.1} parent=1 // pred_fallthru
      _
    %82 = vsyncpa [#allocation3], 1
    %83 = vsyncpa [#allocation4], 1

</llo_original>
